<compile_context>
chip_gen: v7x
topology: tpu7x:2x2x1
jax: 0.10.0
libtpu: 0.0.40
codegen_flags: <defaults>
</compile_context>

<pallas_src>
import jax
import jax.numpy as jnp
from jax.experimental import pallas as pl
from jax.experimental.pallas import tpu as pltpu


def _mlp_kernel(x_ref, w1_ref, b1_ref, w2_ref, b2_ref, wo_ref, bo_ref, out_ref):
    # hidden layer 1: relu(x @ W1 + b1)
    h = jnp.dot(x_ref[...], w1_ref[...], preferred_element_type=jnp.float32)
    h = jnp.maximum(h + b1_ref[...], 0.0)
    # hidden layer 2: relu(h @ W2 + b2)
    h = jnp.dot(h, w2_ref[...], preferred_element_type=jnp.float32)
    h = jnp.maximum(h + b2_ref[...], 0.0)
    # output layer: action_mean = h @ Wo + bo   (no activation)
    y = jnp.dot(h, wo_ref[...], preferred_element_type=jnp.float32)
    out_ref[...] = (y + bo_ref[...]).astype(out_ref.dtype)


def _round_up(n, m):
    return ((n + m - 1) // m) * m


def mlp_forward(x, params, *, tile_b=512):
    """Fused MLP forward.

    params = (w1, b1, w2, b2, wo, bo) with w: (in, out), b: (1, out).
    x: (batch, state_dim) float32.  Returns (batch, action_dim).
    """
    w1, b1, w2, b2, wo, bo = params
    batch, state_dim = x.shape
    action_dim = wo.shape[1]

    # Batch tile: multiple of 8 (f32 sublane), capped at tile_b, and the padded
    # batch is a multiple of the tile so the grid divides evenly.
    tb = min(tile_b, _round_up(batch, 8))
    padded = _round_up(batch, tb)
    if padded != batch:
        x = jnp.pad(x, ((0, padded - batch), (0, 0)))

    grid = (padded // tb,)

    # Weights / biases: full-array blocks with constant index maps -> they are
    # DMA'd once and stay VMEM-resident across all batch tiles.
    def resident(a):
        return pl.BlockSpec(a.shape, lambda i: (0,) * a.ndim)

    out = pl.pallas_call(
        _mlp_kernel,
        out_shape=jax.ShapeDtypeStruct((padded, action_dim), x.dtype),
        grid=grid,
        in_specs=[
            pl.BlockSpec((tb, state_dim), lambda i: (i, 0)),  # x: tiled on batch
            resident(w1), resident(b1),
            resident(w2), resident(b2),
            resident(wo), resident(bo),
        ],
        out_specs=pl.BlockSpec((tb, action_dim), lambda i: (i, 0)),
        compiler_params=pltpu.CompilerParams(
            # Batch tiles are independent -> shard across TCs (v7x megacore).
            dimension_semantics=("parallel",),
        ),
    )(x, w1, b1, w2, b2, wo, bo)

    return out[:batch] if padded != batch else out


def init_params(key, state_dim, action_dim, hidden_size):
    """Deterministic init matching the module's layer shapes.

    PyTorch nn.Linear(in, out) holds weight (out, in); we store the transpose
    (in, out) so the kernel does x @ W + b.
    """
    dims = [state_dim] + list(hidden_size) + [action_dim]
    params = []
    for i in range(len(dims) - 1):
        key, kw = jax.random.split(key)
        fan_in = dims[i]
        bound = 1.0 / jnp.sqrt(fan_in)
        w = jax.random.uniform(kw, (dims[i], dims[i + 1]),
                               minval=-bound, maxval=bound, dtype=jnp.float32)
        b = jnp.zeros((1, dims[i + 1]), dtype=jnp.float32)
        params.extend([w, b])
    return tuple(params)


def reference_forward(x, params):
    w1, b1, w2, b2, wo, bo = params
    h = jnp.maximum(x @ w1 + b1, 0.0)
    h = jnp.maximum(h @ w2 + b2, 0.0)
    return h @ wo + bo


if __name__ == "__main__":
    state_dim, action_dim = 32, 4
    hidden_size = (64, 64)

    key = jax.random.PRNGKey(0)
    kx, kp, kx2 = jax.random.split(key, 3)
    params = init_params(kp, state_dim, action_dim, hidden_size)

    # Small single-tile case (typical RL inference batch).
    batch = 8
    x = jax.random.normal(kx, (batch, state_dim), dtype=jnp.float32)
    out = jax.block_until_ready(mlp_forward(x, params))
    ref = reference_forward(x, params)
    assert out.shape == (batch, action_dim), out.shape
    assert jnp.allclose(out, ref, atol=1e-5, rtol=1e-5), \
        float(jnp.max(jnp.abs(out - ref)))

    # Ragged multi-tile case: exercises the batch grid + padding path.
    batch2 = 50
    x2 = jax.random.normal(kx2, (batch2, state_dim), dtype=jnp.float32)
    out2 = jax.block_until_ready(mlp_forward(x2, params, tile_b=16))
    ref2 = reference_forward(x2, params)
    assert out2.shape == (batch2, action_dim), out2.shape
    assert jnp.allclose(out2, ref2, atol=1e-5, rtol=1e-5), \
        float(jnp.max(jnp.abs(out2 - ref2)))

    print("KERNEL_OK")
</pallas_src>

<mosaic_0001>
module attributes {stable_mosaic.version = 11 : i64} {
  func.func @_mlp_kernel(%arg0: i32, %arg1: memref<8x32xf32, #tpu.memory_space<vmem>>, %arg2: memref<32x64xf32, #tpu.memory_space<vmem>>, %arg3: memref<1x64xf32, #tpu.memory_space<vmem>>, %arg4: memref<64x64xf32, #tpu.memory_space<vmem>>, %arg5: memref<1x64xf32, #tpu.memory_space<vmem>>, %arg6: memref<64x4xf32, #tpu.memory_space<vmem>>, %arg7: memref<1x4xf32, #tpu.memory_space<vmem>>, %arg8: memref<8x4xf32, #tpu.memory_space<vmem>>) attributes {dimension_semantics = [#tpu.dimension_semantics<parallel>], iteration_bounds = array<i64: 1>, scalar_prefetch = 0 : i64, scratch_operands = 0 : i64, tpu.core_type = #tpu.core_type<tc>, window_params = [{transform_indices = @transform_0, window_bounds = array<i64: 8, 32>}, {pipeline_mode = #tpu.pipeline_mode<synchronous>, transform_indices = @transform_1, window_bounds = array<i64: 32, 64>}, {pipeline_mode = #tpu.pipeline_mode<synchronous>, transform_indices = @transform_2, window_bounds = array<i64: 1, 64>}, {pipeline_mode = #tpu.pipeline_mode<synchronous>, transform_indices = @transform_3, window_bounds = array<i64: 64, 64>}, {pipeline_mode = #tpu.pipeline_mode<synchronous>, transform_indices = @transform_4, window_bounds = array<i64: 1, 64>}, {pipeline_mode = #tpu.pipeline_mode<synchronous>, transform_indices = @transform_5, window_bounds = array<i64: 64, 4>}, {pipeline_mode = #tpu.pipeline_mode<synchronous>, transform_indices = @transform_6, window_bounds = array<i64: 1, 4>}, {transform_indices = @transform_7, window_bounds = array<i64: 8, 4>}]} {
    %c0 = arith.constant 0 : index
    %c0_0 = arith.constant 0 : index
    %0 = vector.load %arg1[%c0, %c0_0] : memref<8x32xf32, #tpu.memory_space<vmem>>, vector<8x32xf32>
    %c0_1 = arith.constant 0 : index
    %c0_2 = arith.constant 0 : index
    %1 = vector.load %arg2[%c0_1, %c0_2] : memref<32x64xf32, #tpu.memory_space<vmem>>, vector<32x64xf32>
    %cst = arith.constant dense<0.000000e+00> : vector<8x64xf32>
    %2 = tpu.matmul %0, %1, %cst {dimension_numbers = #tpu.dot_dimension_numbers<[1], [0], [0], [1], [0, 0, 1, 1], [], []>} : vector<8x32xf32>, vector<32x64xf32>, vector<8x64xf32> -> vector<8x64xf32>
    %c0_3 = arith.constant 0 : index
    %c0_4 = arith.constant 0 : index
    %3 = vector.load %arg3[%c0_3, %c0_4] : memref<1x64xf32, #tpu.memory_space<vmem>>, vector<1x64xf32>
    %4 = vector.broadcast %3 : vector<1x64xf32> to vector<8x64xf32>
    %5 = arith.addf %2, %4 : vector<8x64xf32>
    %cst_5 = arith.constant 0.000000e+00 : f32
    %6 = vector.broadcast %cst_5 : f32 to vector<8x64xf32>
    %7 = arith.maximumf %5, %6 : vector<8x64xf32>
    %c0_6 = arith.constant 0 : index
    %c0_7 = arith.constant 0 : index
    %8 = vector.load %arg4[%c0_6, %c0_7] : memref<64x64xf32, #tpu.memory_space<vmem>>, vector<64x64xf32>
    %cst_8 = arith.constant dense<0.000000e+00> : vector<8x64xf32>
    %9 = tpu.matmul %7, %8, %cst_8 {dimension_numbers = #tpu.dot_dimension_numbers<[1], [0], [0], [1], [0, 0, 1, 1], [], []>} : vector<8x64xf32>, vector<64x64xf32>, vector<8x64xf32> -> vector<8x64xf32>
    %c0_9 = arith.constant 0 : index
    %c0_10 = arith.constant 0 : index
    %10 = vector.load %arg5[%c0_9, %c0_10] : memref<1x64xf32, #tpu.memory_space<vmem>>, vector<1x64xf32>
    %11 = vector.broadcast %10 : vector<1x64xf32> to vector<8x64xf32>
    %12 = arith.addf %9, %11 : vector<8x64xf32>
    %cst_11 = arith.constant 0.000000e+00 : f32
    %13 = vector.broadcast %cst_11 : f32 to vector<8x64xf32>
    %14 = arith.maximumf %12, %13 : vector<8x64xf32>
    %c0_12 = arith.constant 0 : index
    %c0_13 = arith.constant 0 : index
    %15 = vector.load %arg6[%c0_12, %c0_13] : memref<64x4xf32, #tpu.memory_space<vmem>>, vector<64x4xf32>
    %cst_14 = arith.constant dense<0.000000e+00> : vector<8x4xf32>
    %16 = tpu.matmul %14, %15, %cst_14 {dimension_numbers = #tpu.dot_dimension_numbers<[1], [0], [0], [1], [0, 0, 1, 1], [], []>} : vector<8x64xf32>, vector<64x4xf32>, vector<8x4xf32> -> vector<8x4xf32>
    %c0_15 = arith.constant 0 : index
    %c0_16 = arith.constant 0 : index
    %17 = vector.load %arg7[%c0_15, %c0_16] : memref<1x4xf32, #tpu.memory_space<vmem>>, vector<1x4xf32>
    %18 = vector.broadcast %17 : vector<1x4xf32> to vector<8x4xf32>
    %19 = arith.addf %16, %18 : vector<8x4xf32>
    %c0_17 = arith.constant 0 : index
    %c0_18 = arith.constant 0 : index
    %20 = vector.load %arg8[%c0_17, %c0_18] : memref<8x4xf32, #tpu.memory_space<vmem>>, vector<8x4xf32>
    tpu.vector_store %arg8[%c0_17, %c0_18], %19 {strides = array<i32>} : memref<8x4xf32, #tpu.memory_space<vmem>>, vector<8x4xf32>,
    return
  }
  func.func @transform_0(%arg0: i32) -> (i32, i32) {
    %c0_i32 = arith.constant 0 : i32
    %c0_i32_0 = arith.constant 0 : i32
    return %arg0, %c0_i32 : i32, i32
  }
  func.func @transform_1(%arg0: i32) -> (i32, i32) {
    %c0_i32 = arith.constant 0 : i32
    %c0_i32_0 = arith.constant 0 : i32
    %c0_i32_1 = arith.constant 0 : i32
    return %c0_i32, %c0_i32_0 : i32, i32
  }
  func.func @transform_2(%arg0: i32) -> (i32, i32) {
    %c0_i32 = arith.constant 0 : i32
    %c0_i32_0 = arith.constant 0 : i32
    %c0_i32_1 = arith.constant 0 : i32
    return %c0_i32, %c0_i32_0 : i32, i32
  }
  func.func @transform_3(%arg0: i32) -> (i32, i32) {
    %c0_i32 = arith.constant 0 : i32
    %c0_i32_0 = arith.constant 0 : i32
    %c0_i32_1 = arith.constant 0 : i32
    return %c0_i32, %c0_i32_0 : i32, i32
  }
  func.func @transform_4(%arg0: i32) -> (i32, i32) {
    %c0_i32 = arith.constant 0 : i32
    %c0_i32_0 = arith.constant 0 : i32
    %c0_i32_1 = arith.constant 0 : i32
    return %c0_i32, %c0_i32_0 : i32, i32
  }
  func.func @transform_5(%arg0: i32) -> (i32, i32) {
    %c0_i32 = arith.constant 0 : i32
    %c0_i32_0 = arith.constant 0 : i32
    %c0_i32_1 = arith.constant 0 : i32
    return %c0_i32, %c0_i32_0 : i32, i32
  }
  func.func @transform_6(%arg0: i32) -> (i32, i32) {
    %c0_i32 = arith.constant 0 : i32
    %c0_i32_0 = arith.constant 0 : i32
    %c0_i32_1 = arith.constant 0 : i32
    return %c0_i32, %c0_i32_0 : i32, i32
  }
  func.func @transform_7(%arg0: i32) -> (i32, i32) {
    %c0_i32 = arith.constant 0 : i32
    %c0_i32_0 = arith.constant 0 : i32
    return %arg0, %c0_i32 : i32, i32
  }
}

</mosaic_0001>

<llo_original>
// kernel: tpu_custom_call.1
$region0: #{tpu_custom_call.1}
  #allocation0 [shape = 'u32[]', space=smem, size = 0x4, offset = 0x4, fixed_abs, tag = 'smem constant byte address 0x4 - core index']
  #allocation1 [shape = 'u32[144,128]{1,0:T(1,128)}', space=vmem, size = 0x12000, scoped, tag = 'internal scratch']
  %s0 = inlined_call_operand.vmem [shape: f32[8,32], index: 0, kind: input, shape index: {}]
  %s1 = inlined_call_operand.hbm [shape: f32[32,64], index: 1, kind: input, shape index: {}]
  %s2 = inlined_call_operand.vmem [shape: f32[1,64], index: 2, kind: input, shape index: {}]
  %s3 = inlined_call_operand.vmem [shape: f32[64,64], index: 3, kind: input, shape index: {}]
  %s4 = inlined_call_operand.vmem [shape: f32[1,64], index: 4, kind: input, shape index: {}]
  %s5 = inlined_call_operand.vmem [shape: f32[64,4], index: 5, kind: input, shape index: {}]
  %s6 = inlined_call_operand.vmem [shape: f32[1,4], index: 6, kind: input, shape index: {}]
  %s7 = inlined_call_operand.vmem [shape: f32[8,4], index: 7, kind: output, shape index: {}]
  %s8 = sld [smem:[#allocation0]]
  $region42: #{tpu_custom_call.1} parent=0
    _
  %s10 = ssub.s32 1, %s8
  %s11 = scalar_select 0, %s10, %s8
  $region1: #{tpu_custom_call.1} parent=0
    #allocation2 [shape = 'u8[16384]{0}', space=vmem, size = 0x4000, scoped, tag = 'input window, operand 1, single buffered']
    #allocation3 [shape = 's32[1]{0}', space=sflag, size = 0x4, scoped, tag = 'scoped memory for tpu_custom_call.1']
    %12 = vsyncpa [#allocation3], 0
    // Predicated region
    $region2: #{tpu_custom_call.1} parent=1 // pred_check
      _
    $region3: #{tpu_custom_call.1} parent=1 // pred_check_branch
      %14 = sbr.rel (0) target = $region5
    $region4: #{tpu_custom_call.1} parent=1 // pred_region
      _
    $region5: #{tpu_custom_call.1} parent=1 // pred_fallthru
      _
    // Predicated region
    $region6: #{tpu_custom_call.1} parent=1 // pred_check
      _
    $region7: #{tpu_custom_call.1} parent=1 // pred_check_branch
      %16 = sbr.rel (0) target = $region9
    $region8: #{tpu_custom_call.1} parent=1 // pred_region
      %s18 = ssub.s32 512, 512
      %19 = vsyncadd [#allocation3], %s18
      %s20 = sshll.u32 [#allocation2], 4
      %s21 = int_to_ptr.vmem [resolvable:$true] %s20
      %26 = dma.hbm_to_vmem [thread:$0]  %s1, 512, %s21, [#allocation3], 128, 128, 8
    $region9: #{tpu_custom_call.1} parent=1 // pred_fallthru
      _
    // Predicated region
    $region10: #{tpu_custom_call.1} parent=1 // pred_check
      _
    $region11: #{tpu_custom_call.1} parent=1 // pred_check_branch
      %28 = sbr.rel (0) target = $region13
    $region12: #{tpu_custom_call.1} parent=1 // pred_region
      _
    $region13: #{tpu_custom_call.1} parent=1 // pred_fallthru
      _
    // Predicated region
    $region14: #{tpu_custom_call.1} parent=1 // pred_check
      _
    $region15: #{tpu_custom_call.1} parent=1 // pred_check_branch
      %30 = sbr.rel (0) target = $region17
    $region16: #{tpu_custom_call.1} parent=1 // pred_region
      _
    $region17: #{tpu_custom_call.1} parent=1 // pred_fallthru
      _
    // Predicated region
    $region18: #{tpu_custom_call.1} parent=1 // pred_check
      _
    $region19: #{tpu_custom_call.1} parent=1 // pred_check_branch
      %32 = sbr.rel (0) target = $region21
    $region20: #{tpu_custom_call.1} parent=1 // pred_region
      _
    $region21: #{tpu_custom_call.1} parent=1 // pred_fallthru
      _
    // Predicated region
    $region22: #{tpu_custom_call.1} parent=1 // pred_check
      _
    $region23: #{tpu_custom_call.1} parent=1 // pred_check_branch
      %34 = sbr.rel (0) target = $region25
    $region24: #{tpu_custom_call.1} parent=1 // pred_region
      _
    $region25: #{tpu_custom_call.1} parent=1 // pred_fallthru
      _
    // Predicated region
    $region26: #{tpu_custom_call.1} parent=1 // pred_check
      _
    $region27: #{tpu_custom_call.1} parent=1 // pred_check_branch
      %36 = sbr.rel (0) target = $region29
    $region28: #{tpu_custom_call.1} parent=1 // pred_region
      _
    $region29: #{tpu_custom_call.1} parent=1 // pred_fallthru
      _
    // Predicated region
    $region30: #{tpu_custom_call.1} parent=1 // pred_check
      _
    $region31: #{tpu_custom_call.1} parent=1 // pred_check_branch
      %38 = sbr.rel (0) target = $region33
    $region32: #{tpu_custom_call.1} parent=1 // pred_region
      %39 = dma.done [#allocation3], 512
    $region33: #{tpu_custom_call.1} parent=1 // pred_fallthru
      _
    %v40 = vld [vmem:[%s0] sm:$0xff]
    %v41 = vld [vmem:[#allocation2] sm:$0xff]
    %v42 = vld [vmem:[#allocation2 + $0x8] sm:$0xff]
    %v43 = vld [vmem:[#allocation2 + $0x10] sm:$0xff]
    %v44 = vld [vmem:[#allocation2 + $0x18] sm:$0xff]
    %v45 = vld [vmem:[%s2] sm:$0x1]
    %v47 = vlaneseq
    %v48 = vshrl.u32 %v47, 7
    %v49 = vsub.s32 0, %v48
    %v50 = vrot.slane %v45, %v49
    %vm52 = vcmask 261120
    %v54 = vsel %vm52, %v40, 0
    %56 = vmatprep.subr.mxu0 0.0
    %57 = vmatpush1.msra.mxu0 %v41
    %58 = vmatprep.subr.mxu0 0.0
    %59 = vmatpush1.msra.mxu0 %v42
    %60 = vmatprep.subr.mxu0 0.0
    %61 = vmatpush1.msra.mxu0 %v43
    %62 = vmatprep.subr.mxu0 0.0
    %63 = vmatpush1.msra.mxu0 %v44
    %64 = vmatprep.subr.mxu0 0.0
    %65 = vmatpush1.msra.mxu0 0.0
    %66 = vmatprep.subr.mxu0 0.0
    %67 = vmatpush1.msra.mxu0 0.0
    %68 = vmatprep.subr.mxu0 0.0
    %69 = vmatpush1.msra.mxu0 0.0
    %70 = vmatprep.subr.mxu0 0.0
    %71 = vmatpush1.msra.mxu0 0.0
    %72 = vmatprep.subr.mxu0 0.0
    %73 = vmatpush1.msra.mxu0 0.0
    %74 = vmatprep.subr.mxu0 0.0
    %75 = vmatpush1.msra.mxu0 0.0
    %76 = vmatprep.subr.mxu0 0.0
    %77 = vmatpush1.msra.mxu0 0.0
    %78 = vmatprep.subr.mxu0 0.0
    %79 = vmatpush1.msra.mxu0 0.0
    %80 = vmatprep.subr.mxu0 0.0
    %81 = vmatpush1.msra.mxu0 0.0
    %82 = vmatprep.subr.mxu0 0.0
    %83 = vmatpush1.msra.mxu0 0.0
    %84 = vmatprep.subr.mxu0 0.0
    %85 = vmatpush1.msra.mxu0 0.0
    %86 = vmatprep.subr.mxu0 0.0
    %87 = vmatpush1.msra.mxu0 0.0
    %88 = vmatprep.subr.mxu0 0.0
    %89 = vmatpush1.msra.mxu0 0.0
    %90 = vmatprep.subr.mxu0 0.0
    %91 = vmatpush1.msra.mxu0 0.0
    %92 = vmatprep.subr.mxu0 0.0
    %93 = vmatpush1.msra.mxu0 0.0
    %94 = vmatprep.subr.mxu0 0.0
    %95 = vmatpush1.msra.mxu0 0.0
    %96 = vmatprep.subr.mxu0 0.0
    %97 = vmatpush1.msra.mxu0 0.0
    %98 = vmatprep.subr.mxu0 0.0
    %99 = vmatpush1.msra.mxu0 0.0
    %100 = vmatprep.subr.mxu0 0.0
    %101 = vmatpush1.msra.mxu0 0.0
    %102 = vmatprep.subr.mxu0 0.0
    %103 = vmatpush1.msra.mxu0 0.0
    %104 = vmatprep.subr.mxu0 0.0
    %105 = vmatpush1.msra.mxu0 0.0
    %106 = vmatprep.subr.mxu0 0.0
    %107 = vmatpush1.msra.mxu0 0.0
    %108 = vmatprep.subr.mxu0 0.0
    %109 = vmatpush1.msra.mxu0 0.0
    %110 = vmatprep.subr.mxu0 0.0
    %111 = vmatpush1.msra.mxu0 0.0
    %112 = vmatprep.subr.mxu0 0.0
    %113 = vmatpush1.msra.mxu0 0.0
    %114 = vmatprep.subr.mxu0 0.0
    %115 = vmatpush1.msra.mxu0 0.0
    %116 = vmatprep.subr.mxu0 0.0
    %117 = vmatpush1.msra.mxu0 0.0
    %118 = vmatprep.subr.mxu0 0.0
    %119 = vmatpush1.msra.mxu0 0.0
    %120 = vmatprep.mubr.f32.mxu0 0.0
    %121 = vmatmul.mubr.f32.gmra.mrb[0].mxu0 %v54
    %v122 = vpop.f32.mrb[0].mxu0
    %v123 = vadd.f32 %v50, %v122
    %v124 = vpop.f32.mrb[0].mxu0
    %125 = vdwg.mxu0
    %v126 = vmax.f32 %v123, 0.0
    %v127 = vld [vmem:[%s3] sm:$0xff]
    %v128 = vld [vmem:[%s3 + $0x8] sm:$0xff]
    %v129 = vld [vmem:[%s3 + $0x10] sm:$0xff]
    %v130 = vld [vmem:[%s3 + $0x18] sm:$0xff]
    %v131 = vld [vmem:[%s3 + $0x20] sm:$0xff]
    %v132 = vld [vmem:[%s3 + $0x28] sm:$0xff]
    %v133 = vld [vmem:[%s3 + $0x30] sm:$0xff]
    %v134 = vld [vmem:[%s3 + $0x38] sm:$0xff]
    %v135 = vld [vmem:[%s4] sm:$0x1]
    %v137 = vlaneseq
    %v138 = vshrl.u32 %v137, 7
    %v139 = vsub.s32 0, %v138
    %v140 = vrot.slane %v135, %v139
    %vm142 = vcmask 523264
    %v144 = vsel %vm142, %v126, 0
    %146 = vmatprep.subr.mxu0 0.0
    %147 = vmatpush1.msra.mxu0 %v127
    %148 = vmatprep.subr.mxu0 0.0
    %149 = vmatpush1.msra.mxu0 %v128
    %150 = vmatprep.subr.mxu0 0.0
    %151 = vmatpush1.msra.mxu0 %v129
    %152 = vmatprep.subr.mxu0 0.0
    %153 = vmatpush1.msra.mxu0 %v130
    %154 = vmatprep.subr.mxu0 0.0
    %155 = vmatpush1.msra.mxu0 %v131
    %156 = vmatprep.subr.mxu0 0.0
    %157 = vmatpush1.msra.mxu0 %v132
    %158 = vmatprep.subr.mxu0 0.0
    %159 = vmatpush1.msra.mxu0 %v133
    %160 = vmatprep.subr.mxu0 0.0
    %161 = vmatpush1.msra.mxu0 %v134
    %162 = vmatprep.subr.mxu0 0.0
    %163 = vmatpush1.msra.mxu0 0.0
    %164 = vmatprep.subr.mxu0 0.0
    %165 = vmatpush1.msra.mxu0 0.0
    %166 = vmatprep.subr.mxu0 0.0
    %167 = vmatpush1.msra.mxu0 0.0
    %168 = vmatprep.subr.mxu0 0.0
    %169 = vmatpush1.msra.mxu0 0.0
    %170 = vmatprep.subr.mxu0 0.0
    %171 = vmatpush1.msra.mxu0 0.0
    %172 = vmatprep.subr.mxu0 0.0
    %173 = vmatpush1.msra.mxu0 0.0
    %174 = vmatprep.subr.mxu0 0.0
    %175 = vmatpush1.msra.mxu0 0.0
    %176 = vmatprep.subr.mxu0 0.0
    %177 = vmatpush1.msra.mxu0 0.0
    %178 = vmatprep.subr.mxu0 0.0
    %179 = vmatpush1.msra.mxu0 0.0
    %180 = vmatprep.subr.mxu0 0.0
    %181 = vmatpush1.msra.mxu0 0.0
    %182 = vmatprep.subr.mxu0 0.0
    %183 = vmatpush1.msra.mxu0 0.0
    %184 = vmatprep.subr.mxu0 0.0
    %185 = vmatpush1.msra.mxu0 0.0
    %186 = vmatprep.subr.mxu0 0.0
    %187 = vmatpush1.msra.mxu0 0.0
    %188 = vmatprep.subr.mxu0 0.0
    %189 = vmatpush1.msra.mxu0 0.0
    %190 = vmatprep.subr.mxu0 0.0
    %191 = vmatpush1.msra.mxu0 0.0
    %192 = vmatprep.subr.mxu0 0.0
    %193 = vmatpush1.msra.mxu0 0.0
    %194 = vmatprep.subr.mxu0 0.0
    %195 = vmatpush1.msra.mxu0 0.0
    %196 = vmatprep.subr.mxu0 0.0
    %197 = vmatpush1.msra.mxu0 0.0
    %198 = vmatprep.subr.mxu0 0.0
    %199 = vmatpush1.msra.mxu0 0.0
    %200 = vmatprep.subr.mxu0 0.0
    %201 = vmatpush1.msra.mxu0 0.0
    %202 = vmatprep.subr.mxu0 0.0
    %203 = vmatpush1.msra.mxu0 0.0
    %204 = vmatprep.subr.mxu0 0.0
    %205 = vmatpush1.msra.mxu0 0.0
    %206 = vmatprep.subr.mxu0 0.0
    %207 = vmatpush1.msra.mxu0 0.0
    %208 = vmatprep.subr.mxu0 0.0
    %209 = vmatpush1.msra.mxu0 0.0
    %210 = vmatprep.mubr.f32.mxu0 0.0
    %211 = vmatmul.mubr.f32.gmra.mrb[0].mxu0 %v144
    %v212 = vpop.f32.mrb[0].mxu0
    %v213 = vadd.f32 %v140, %v212
    %v214 = vpop.f32.mrb[0].mxu0
    %215 = vdwg.mxu0
    %v216 = vmax.f32 %v213, 0.0
    %v217 = vld [vmem:[%s5] sm:$0xff]
    %v218 = vld [vmem:[%s5 + $0x8] sm:$0xff]
    %v219 = vld [vmem:[%s5 + $0x10] sm:$0xff]
    %v220 = vld [vmem:[%s5 + $0x18] sm:$0xff]
    %v221 = vld [vmem:[%s5 + $0x20] sm:$0xff]
    %v222 = vld [vmem:[%s5 + $0x28] sm:$0xff]
    %v223 = vld [vmem:[%s5 + $0x30] sm:$0xff]
    %v224 = vld [vmem:[%s5 + $0x38] sm:$0xff]
    %v225 = vld [vmem:[%s6] sm:$0x1]
    %v227 = vlaneseq
    %v228 = vshrl.u32 %v227, 7
    %v229 = vsub.s32 0, %v228
    %v230 = vrot.slane %v225, %v229
    %v233 = vsel %vm142, %v216, 0
    %235 = vmatprep.subr.mxu0 0.0
    %236 = vmatpush1.msra.mxu0 %v217
    %237 = vmatprep.subr.mxu0 0.0
    %238 = vmatpush1.msra.mxu0 %v218
    %239 = vmatprep.subr.mxu0 0.0
    %240 = vmatpush1.msra.mxu0 %v219
    %241 = vmatprep.subr.mxu0 0.0
    %242 = vmatpush1.msra.mxu0 %v220
    %243 = vmatprep.subr.mxu0 0.0
    %244 = vmatpush1.msra.mxu0 %v221
    %245 = vmatprep.subr.mxu0 0.0
    %246 = vmatpush1.msra.mxu0 %v222
    %247 = vmatprep.subr.mxu0 0.0
    %248 = vmatpush1.msra.mxu0 %v223
    %249 = vmatprep.subr.mxu0 0.0
    %250 = vmatpush1.msra.mxu0 %v224
    %251 = vmatprep.subr.mxu0 0.0
    %252 = vmatpush1.msra.mxu0 0.0
    %253 = vmatprep.subr.mxu0 0.0
    %254 = vmatpush1.msra.mxu0 0.0
    %255 = vmatprep.subr.mxu0 0.0
    %256 = vmatpush1.msra.mxu0 0.0
    %257 = vmatprep.subr.mxu0 0.0
    %258 = vmatpush1.msra.mxu0 0.0
    %259 = vmatprep.subr.mxu0 0.0
    %260 = vmatpush1.msra.mxu0 0.0
    %261 = vmatprep.subr.mxu0 0.0
    %262 = vmatpush1.msra.mxu0 0.0
    %263 = vmatprep.subr.mxu0 0.0
    %264 = vmatpush1.msra.mxu0 0.0
    %265 = vmatprep.subr.mxu0 0.0
    %266 = vmatpush1.msra.mxu0 0.0
    %267 = vmatprep.subr.mxu0 0.0
    %268 = vmatpush1.msra.mxu0 0.0
    %269 = vmatprep.subr.mxu0 0.0
    %270 = vmatpush1.msra.mxu0 0.0
    %271 = vmatprep.subr.mxu0 0.0
    %272 = vmatpush1.msra.mxu0 0.0
    %273 = vmatprep.subr.mxu0 0.0
    %274 = vmatpush1.msra.mxu0 0.0
    %275 = vmatprep.subr.mxu0 0.0
    %276 = vmatpush1.msra.mxu0 0.0
    %277 = vmatprep.subr.mxu0 0.0
    %278 = vmatpush1.msra.mxu0 0.0
    %279 = vmatprep.subr.mxu0 0.0
    %280 = vmatpush1.msra.mxu0 0.0
    %281 = vmatprep.subr.mxu0 0.0
    %282 = vmatpush1.msra.mxu0 0.0
    %283 = vmatprep.subr.mxu0 0.0
    %284 = vmatpush1.msra.mxu0 0.0
    %285 = vmatprep.subr.mxu0 0.0
    %286 = vmatpush1.msra.mxu0 0.0
    %287 = vmatprep.subr.mxu0 0.0
    %288 = vmatpush1.msra.mxu0 0.0
    %289 = vmatprep.subr.mxu0 0.0
    %290 = vmatpush1.msra.mxu0 0.0
    %291 = vmatprep.subr.mxu0 0.0
    %292 = vmatpush1.msra.mxu0 0.0
    %293 = vmatprep.subr.mxu0 0.0
    %294 = vmatpush1.msra.mxu0 0.0
    %295 = vmatprep.subr.mxu0 0.0
    %296 = vmatpush1.msra.mxu0 0.0
    %297 = vmatprep.subr.mxu0 0.0
    %298 = vmatpush1.msra.mxu0 0.0
    %299 = vmatprep.mubr.f32.mxu0 0.0
    %300 = vmatmul.mubr.f32.gmra.mrb[0].mxu0 %v233
    %v301 = vpop.f32.mrb[0].mxu0
    %v302 = vadd.f32 %v230, %v301
    %v303 = vpop.f32.mrb[0].mxu0
    %304 = vdwg.mxu0
    %vm305 = vcmask 31744
    %306 = vst.msk [vmem:[%s7] sm:$0xff] %vm305, %v302
    // Predicated region
    $region34: #{tpu_custom_call.1} parent=1 // pred_check
      _
    $region35: #{tpu_custom_call.1} parent=1 // pred_check_branch
      %308 = sbr.rel (0) target = $region37
    $region36: #{tpu_custom_call.1} parent=1 // pred_region
      _
    $region37: #{tpu_custom_call.1} parent=1 // pred_fallthru
      _
    // Predicated region
    $region38: #{tpu_custom_call.1} parent=1 // pred_check
      _
    $region39: #{tpu_custom_call.1} parent=1 // pred_check_branch
      %310 = sbr.rel (0) target = $region41
    $region40: #{tpu_custom_call.1} parent=1 // pred_region
      _
    $region41: #{tpu_custom_call.1} parent=1 // pred_fallthru
      _
    %311 = vsyncpa [#allocation3], 1

</llo_original>
